<compile_context>
chip_gen: v6e
topology: v6e:2x2x1
jax: 0.10.0
libtpu: 0.0.40
codegen_flags: <defaults>
</compile_context>

<pallas_src>
import functools

import jax
import jax.numpy as jnp
from jax.experimental import pallas as pl
from jax.experimental.pallas import tpu as pltpu


def _round_up(x, m):
    return ((x + m - 1) // m) * m


# ----------------------------------------------------------------------------
# Pallas kernel: fused (1x1 conv -> BN -> ReLU) x 2 -> max-pool over neighbors
# ----------------------------------------------------------------------------
def _mlp_maxpool_kernel(x_ref, w1_ref, b1_ref, w2_ref, b2_ref, o_ref, *, k):
    tm, cout = o_ref.shape

    # x is already flattened to (tile_m*K, Cin) by the wrapper (no in-kernel
    # reshape on the load side).  Operands are bf16, accumulation is f32.
    x = x_ref[...]                                              # (tm*K, Cin) bf16
    h = jnp.dot(x, w1_ref[...], preferred_element_type=jnp.float32)
    h = jnp.maximum(h + b1_ref[...], 0.0)                       # BN bias + ReLU (f32)

    y = jnp.dot(h.astype(w2_ref.dtype), w2_ref[...],
                preferred_element_type=jnp.float32)
    y = jnp.maximum(y + b2_ref[...], 0.0)                       # BN bias + ReLU (f32)

    # MaxPool2d((1, K)): K stays on the sublane axis, reduce axis=1 (XLU).
    o_ref[...] = jnp.max(y.reshape(tm, k, cout), axis=1).astype(o_ref.dtype)


def _pick_tile_m(bm, k, cin_p, cout_p, vmem_budget):
    """Largest tile_m whose (double-buffered) working set fits the budget."""
    def est(tile_m):
        in_blk = tile_m * k * cin_p * 2            # bf16 input block
        mid = tile_m * k * cout_p * 4              # f32 intermediate (h / y)
        out_blk = tile_m * cout_p * 4              # f32 output block
        wts = (cin_p * cout_p + cout_p * cout_p) * 2 + 2 * cout_p * 4
        return 2 * in_blk + 2 * mid + 2 * out_blk + 2 * wts

    tile_m = 8
    for cand in (2048, 1024, 512, 256, 128, 64, 32, 16, 8):
        if est(cand) <= vmem_budget:
            tile_m = cand
            break
    # Don't over-pad tiny problems; keep sublane-divisibility (multiple of 8).
    tile_m = min(tile_m, _round_up(bm, 8))
    return max(8, tile_m), est(tile_m)


def mlp_maxpool(nx, w1, b1, w2, b2, *, tile_m=None,
                vmem_budget=18 * 1024 * 1024):
    """nx: (BM, K, Cin) f32 -> (BM, Cout) f32."""
    BM, K, Cin = nx.shape
    Cout = w1.shape[1]

    # ---- channel padding to 128 lanes (zeros are numerically inert) ----
    cin_p = _round_up(Cin, 128)
    cout_p = _round_up(Cout, 128)
    w1_p = jnp.pad(w1, ((0, cin_p - Cin), (0, cout_p - Cout))).astype(jnp.bfloat16)
    w2_p = jnp.pad(w2, ((0, cout_p - Cout), (0, cout_p - Cout))).astype(jnp.bfloat16)
    b1_p = jnp.pad(b1, ((0, 0), (0, cout_p - Cout))).astype(jnp.float32)
    b2_p = jnp.pad(b2, ((0, 0), (0, cout_p - Cout))).astype(jnp.float32)

    # ---- tile selection + row padding (regular grid, no single-block fallback)
    if tile_m is None:
        tile_m, est_bytes = _pick_tile_m(BM, K, cin_p, cout_p, vmem_budget)
    else:
        _, est_bytes = _pick_tile_m(BM, K, cin_p, cout_p, vmem_budget)
    bm_p = _round_up(BM, tile_m)
    grid = (bm_p // tile_m,)

    nx_p = jnp.pad(nx, ((0, bm_p - BM), (0, 0), (0, cin_p - Cin)))
    nx2d = nx_p.astype(jnp.bfloat16).reshape(bm_p * K, cin_p)   # flatten in wrapper

    flops = 2 * bm_p * K * cin_p * cout_p + 2 * bm_p * K * cout_p * cout_p
    bytes_accessed = (bm_p * K * cin_p * 2 + bm_p * cout_p * 4 +
                      (cin_p * cout_p + cout_p * cout_p) * 2 + 2 * cout_p * 4)
    vmem_limit = int(min(max(int(1.5 * est_bytes), 32 * 1024 * 1024),
                         56 * 1024 * 1024))

    out = pl.pallas_call(
        functools.partial(_mlp_maxpool_kernel, k=K),
        out_shape=jax.ShapeDtypeStruct((bm_p, cout_p), jnp.float32),
        grid_spec=pltpu.PrefetchScalarGridSpec(
            num_scalar_prefetch=0,
            grid=grid,
            in_specs=[
                pl.BlockSpec((tile_m * K, cin_p), lambda i: (i, 0)),
                pl.BlockSpec((cin_p, cout_p), lambda i: (0, 0)),
                pl.BlockSpec((1, cout_p), lambda i: (0, 0)),
                pl.BlockSpec((cout_p, cout_p), lambda i: (0, 0)),
                pl.BlockSpec((1, cout_p), lambda i: (0, 0)),
            ],
            out_specs=pl.BlockSpec((tile_m, cout_p), lambda i: (i, 0)),
        ),
        compiler_params=pltpu.CompilerParams(
            dimension_semantics=("parallel",),
            vmem_limit_bytes=vmem_limit),
        cost_estimate=pl.CostEstimate(flops=int(flops), transcendentals=0,
                                      bytes_accessed=int(bytes_accessed)),
    )(nx2d, w1_p, b1_p, w2_p, b2_p)

    return out[:BM, :Cout]


# ----------------------------------------------------------------------------
# Plain-JAX glue: furthest point sampling + kNN grouping (data-dependent
# gathers; not a good fit for a static-tiled Pallas kernel at these sizes)
# TODO(synk): FPS / kNN gather remain plain JAX (sequential, data-dependent).
# ----------------------------------------------------------------------------
def furthest_point_sampling(p, M):
    """p: (B, N, 3) -> indices (B, M), starting from index 0 (pointops conv.)."""
    B, N, _ = p.shape

    def per_batch(pts):
        def body(i, state):
            idxs, dists = state
            last = pts[idxs[i - 1]]
            d = jnp.sum((pts - last) ** 2, axis=-1)
            dists = jnp.minimum(dists, d)
            nxt = jnp.argmax(dists).astype(jnp.int32)
            return idxs.at[i].set(nxt), dists

        idxs0 = jnp.zeros((M,), jnp.int32)
        dists0 = jnp.full((N,), jnp.inf, jnp.float32)
        idxs, _ = jax.lax.fori_loop(1, M, body, (idxs0, dists0))
        return idxs

    return jax.vmap(per_batch)(p)


def knn_group(p1, p2, x, K):
    """QueryAndGroup(nsample=K, use_xyz=True): returns (B, M, K, 3+C)."""
    # pairwise squared distances (B, M, N)
    d2 = jnp.sum((p2[:, :, None, :] - p1[:, None, :, :]) ** 2, axis=-1)
    _, idx = jax.lax.top_k(-d2, K)                            # (B, M, K)

    gather = jax.vmap(lambda arr, ind: arr[ind])              # per-batch fancy index
    grouped_xyz = gather(p1, idx)                             # (B, M, K, 3)
    rel_xyz = grouped_xyz - p2[:, :, None, :]                 # relative coords
    xt = jnp.transpose(x, (0, 2, 1))                          # (B, N, C)
    grouped_feat = gather(xt, idx)                            # (B, M, K, C)
    return jnp.concatenate([rel_xyz, grouped_feat], axis=-1)  # (B, M, K, 3+C)


# ----------------------------------------------------------------------------
# TransitionDown forward
# ----------------------------------------------------------------------------
def transition_down(p1, x, params, *, stride=4, num_neighbors=16):
    B, N, _ = p1.shape
    M = N // stride

    # furthest sampling + gathering -> p2
    fps_idx = furthest_point_sampling(p1, M)                  # (B, M)
    p2 = jax.vmap(lambda pts, ind: pts[ind])(p1, fps_idx)     # (B, M, 3)

    # grouping
    nx = knn_group(p1, p2, x, num_neighbors)                  # (B, M, K, 3+C)
    BM = B * M
    nx_flat = nx.reshape(BM, num_neighbors, nx.shape[-1])

    # fused MLP + max-pool (Pallas)
    y_flat = mlp_maxpool(nx_flat, params["w1"], params["b1"],
                         params["w2"], params["b2"])          # (BM, Cout)
    Cout = y_flat.shape[-1]
    y = jnp.transpose(y_flat.reshape(B, M, Cout), (0, 2, 1))  # (B, Cout, M)
    return [p2, y]


def make_params(key, in_channels, out_channels, eps=1e-5):
    """Deterministic parameters; BN (inference mode) folded into weights/bias."""
    c_in = 3 + in_channels
    k1, k2, k3, k4, k5, k6 = jax.random.split(key, 6)

    # Conv2d weights (Cout, Cin, 1, 1) -> stored transposed as (Cin, Cout)
    W1 = jax.random.normal(k1, (out_channels, c_in), jnp.float32) * 0.1
    W2 = jax.random.normal(k2, (out_channels, out_channels), jnp.float32) * 0.1

    # BatchNorm params (gamma, beta, running_mean, running_var)
    g1 = 1.0 + 0.1 * jax.random.normal(k3, (out_channels,), jnp.float32)
    b1 = 0.1 * jax.random.normal(k4, (out_channels,), jnp.float32)
    m1 = jnp.zeros((out_channels,), jnp.float32)
    v1 = jnp.ones((out_channels,), jnp.float32)
    g2 = 1.0 + 0.1 * jax.random.normal(k5, (out_channels,), jnp.float32)
    b2 = 0.1 * jax.random.normal(k6, (out_channels,), jnp.float32)
    m2 = jnp.zeros((out_channels,), jnp.float32)
    v2 = jnp.ones((out_channels,), jnp.float32)

    s1 = g1 / jnp.sqrt(v1 + eps)
    s2 = g2 / jnp.sqrt(v2 + eps)
    return {
        "w1": (W1.T * s1[None, :]).astype(jnp.float32),       # (Cin, Cout)
        "b1": (b1 - m1 * s1)[None, :].astype(jnp.float32),    # (1, Cout)
        "w2": (W2.T * s2[None, :]).astype(jnp.float32),       # (Cout, Cout)
        "b2": (b2 - m2 * s2)[None, :].astype(jnp.float32),    # (1, Cout)
    }


if __name__ == "__main__":
    B, N, C_IN, C_OUT = 2, 64, 4, 8
    STRIDE, K = 4, 16

    key = jax.random.PRNGKey(0)
    kp, kx, kw = jax.random.split(key, 3)
    p1 = jax.random.normal(kp, (B, N, 3), jnp.float32)
    x = jax.random.normal(kx, (B, C_IN, N), jnp.float32)
    params = make_params(kw, C_IN, C_OUT)

    fwd = jax.jit(functools.partial(transition_down, stride=STRIDE,
                                    num_neighbors=K))
    p2, y = fwd(p1, x, params)
    jax.block_until_ready((p2, y))

    assert p2.shape == (B, N // STRIDE, 3), p2.shape
    assert y.shape == (B, C_OUT, N // STRIDE), y.shape
    assert bool(jnp.all(jnp.isfinite(y))) and bool(jnp.all(y >= 0.0))
    print("KERNEL_OK")
</pallas_src>

<mosaic_0001>
module attributes {stable_mosaic.version = 11 : i64} {
  func.func @_mlp_maxpool_kernel(%arg0: i32, %arg1: memref<512x128xbf16, #tpu.memory_space<vmem>>, %arg2: memref<128x128xbf16, #tpu.memory_space<vmem>>, %arg3: memref<1x128xf32, #tpu.memory_space<vmem>>, %arg4: memref<128x128xbf16, #tpu.memory_space<vmem>>, %arg5: memref<1x128xf32, #tpu.memory_space<vmem>>, %arg6: memref<32x128xf32, #tpu.memory_space<vmem>>) attributes {dimension_semantics = [#tpu.dimension_semantics<parallel>], iteration_bounds = array<i64: 1>, scalar_prefetch = 0 : i64, scratch_operands = 0 : i64, tpu.core_type = #tpu.core_type<tc>, window_params = [{transform_indices = @transform_0, window_bounds = array<i64: 512, 128>}, {pipeline_mode = #tpu.pipeline_mode<synchronous>, transform_indices = @transform_1, window_bounds = array<i64: 128, 128>}, {pipeline_mode = #tpu.pipeline_mode<synchronous>, transform_indices = @transform_2, window_bounds = array<i64: 1, 128>}, {pipeline_mode = #tpu.pipeline_mode<synchronous>, transform_indices = @transform_3, window_bounds = array<i64: 128, 128>}, {pipeline_mode = #tpu.pipeline_mode<synchronous>, transform_indices = @transform_4, window_bounds = array<i64: 1, 128>}, {transform_indices = @transform_5, window_bounds = array<i64: 32, 128>}]} {
    %c0 = arith.constant 0 : index
    %c0_0 = arith.constant 0 : index
    %0 = vector.load %arg1[%c0, %c0_0] : memref<512x128xbf16, #tpu.memory_space<vmem>>, vector<512x128xbf16>
    %c0_1 = arith.constant 0 : index
    %c0_2 = arith.constant 0 : index
    %1 = vector.load %arg2[%c0_1, %c0_2] : memref<128x128xbf16, #tpu.memory_space<vmem>>, vector<128x128xbf16>
    %cst = arith.constant dense<0.000000e+00> : vector<512x128xf32>
    %2 = tpu.matmul %0, %1, %cst {dimension_numbers = #tpu.dot_dimension_numbers<[1], [0], [0], [1], [0, 0, 1, 1], [], []>} : vector<512x128xbf16>, vector<128x128xbf16>, vector<512x128xf32> -> vector<512x128xf32>
    %c0_3 = arith.constant 0 : index
    %c0_4 = arith.constant 0 : index
    %3 = vector.load %arg3[%c0_3, %c0_4] : memref<1x128xf32, #tpu.memory_space<vmem>>, vector<1x128xf32>
    %4 = vector.broadcast %3 : vector<1x128xf32> to vector<512x128xf32>
    %5 = arith.addf %2, %4 : vector<512x128xf32>
    %cst_5 = arith.constant 0.000000e+00 : f32
    %6 = vector.broadcast %cst_5 : f32 to vector<512x128xf32>
    %7 = arith.maximumf %5, %6 : vector<512x128xf32>
    %8 = arith.truncf %7 : vector<512x128xf32> to vector<512x128xbf16>
    %c0_6 = arith.constant 0 : index
    %c0_7 = arith.constant 0 : index
    %9 = vector.load %arg4[%c0_6, %c0_7] : memref<128x128xbf16, #tpu.memory_space<vmem>>, vector<128x128xbf16>
    %cst_8 = arith.constant dense<0.000000e+00> : vector<512x128xf32>
    %10 = tpu.matmul %8, %9, %cst_8 {dimension_numbers = #tpu.dot_dimension_numbers<[1], [0], [0], [1], [0, 0, 1, 1], [], []>} : vector<512x128xbf16>, vector<128x128xbf16>, vector<512x128xf32> -> vector<512x128xf32>
    %c0_9 = arith.constant 0 : index
    %c0_10 = arith.constant 0 : index
    %11 = vector.load %arg5[%c0_9, %c0_10] : memref<1x128xf32, #tpu.memory_space<vmem>>, vector<1x128xf32>
    %12 = vector.broadcast %11 : vector<1x128xf32> to vector<512x128xf32>
    %13 = arith.addf %10, %12 : vector<512x128xf32>
    %cst_11 = arith.constant 0.000000e+00 : f32
    %14 = vector.broadcast %cst_11 : f32 to vector<512x128xf32>
    %15 = arith.maximumf %13, %14 : vector<512x128xf32>
    %16 = vector.shape_cast %15 : vector<512x128xf32> to vector<32x16x128xf32>
    %cst_12 = arith.constant dense<0xFF800000> : vector<32x128xf32>
    %17 = vector.multi_reduction <maximumf>, %16, %cst_12 [1] : vector<32x16x128xf32> to vector<32x128xf32>
    %c0_13 = arith.constant 0 : index
    %c0_14 = arith.constant 0 : index
    %18 = vector.load %arg6[%c0_13, %c0_14] : memref<32x128xf32, #tpu.memory_space<vmem>>, vector<32x128xf32>
    tpu.vector_store %arg6[%c0_13, %c0_14], %17 {strides = array<i32>} : memref<32x128xf32, #tpu.memory_space<vmem>>, vector<32x128xf32>,
    return
  }
  func.func @transform_0(%arg0: i32) -> (i32, i32) {
    %c0_i32 = arith.constant 0 : i32
    %c0_i32_0 = arith.constant 0 : i32
    return %arg0, %c0_i32 : i32, i32
  }
  func.func @transform_1(%arg0: i32) -> (i32, i32) {
    %c0_i32 = arith.constant 0 : i32
    %c0_i32_0 = arith.constant 0 : i32
    %c0_i32_1 = arith.constant 0 : i32
    return %c0_i32, %c0_i32_0 : i32, i32
  }
  func.func @transform_2(%arg0: i32) -> (i32, i32) {
    %c0_i32 = arith.constant 0 : i32
    %c0_i32_0 = arith.constant 0 : i32
    %c0_i32_1 = arith.constant 0 : i32
    return %c0_i32, %c0_i32_0 : i32, i32
  }
  func.func @transform_3(%arg0: i32) -> (i32, i32) {
    %c0_i32 = arith.constant 0 : i32
    %c0_i32_0 = arith.constant 0 : i32
    %c0_i32_1 = arith.constant 0 : i32
    return %c0_i32, %c0_i32_0 : i32, i32
  }
  func.func @transform_4(%arg0: i32) -> (i32, i32) {
    %c0_i32 = arith.constant 0 : i32
    %c0_i32_0 = arith.constant 0 : i32
    %c0_i32_1 = arith.constant 0 : i32
    return %c0_i32, %c0_i32_0 : i32, i32
  }
  func.func @transform_5(%arg0: i32) -> (i32, i32) {
    %c0_i32 = arith.constant 0 : i32
    %c0_i32_0 = arith.constant 0 : i32
    return %arg0, %c0_i32 : i32, i32
  }
}

</mosaic_0001>

<llo_original>
// kernel: custom-call.8
$region0: #{custom-call.8}
  %s0 = inlined_call_operand.vmem [shape: f32[2,64], index: 0, kind: output, shape index: {}]

// kernel: neg.1
$region0: #{neg.1}
  #allocation0 [shape = 's32[1]{0}', space=sflag, size = 0x4, scoped, tag = 'scoped memory for neg.1']
  %s0 = inlined_call_operand.vmem [shape: f32[2,16,64], index: 0, kind: input, shape index: {}]
  %s1 = inlined_call_operand.vmem [shape: f32[2,16,64], index: 1, kind: output, shape index: {}]
  %v2 = vld [vmem:[%s0] sm:$0xff]
  %3 = xla_tuple %v2
  %4 = xla_tuple %3
  %v5 = vxor.u32 %v2, 2147483648
  %6 = xla_tuple %v5
  %7 = vst [vmem:[%s1] sm:$0xff] %v5
  %s8 = scalar_lea.vmem %s0, 16
  %v9 = vld [vmem:[%s8] sm:$0xff]
  %10 = xla_tuple %v9
  %11 = xla_tuple %10
  %v12 = vxor.u32 %v9, 2147483648
  %13 = xla_tuple %v12
  %s14 = scalar_lea.vmem %s1, 16
  %15 = vst [vmem:[%s14] sm:$0xff] %v12
  %s16 = scalar_lea.vmem %s0, 8
  %v17 = vld [vmem:[%s16] sm:$0xff]
  %18 = xla_tuple %v17
  %19 = xla_tuple %18
  %v20 = vxor.u32 %v17, 2147483648
  %21 = xla_tuple %v20
  %s22 = scalar_lea.vmem %s1, 8
  %23 = vst [vmem:[%s22] sm:$0xff] %v20
  %s24 = scalar_lea.vmem %s0, 24
  %v25 = vld [vmem:[%s24] sm:$0xff]
  %26 = xla_tuple %v25
  %27 = xla_tuple %26
  %v28 = vxor.u32 %v25, 2147483648
  %29 = xla_tuple %v28
  %s30 = scalar_lea.vmem %s1, 24
  %31 = vst [vmem:[%s30] sm:$0xff] %v28

// kernel: transition_down.1
$region0: #{transition_down.1}
  #allocation0 [shape = 'u32[]', space=smem, size = 0x4, offset = 0x4, fixed_abs, tag = 'smem constant byte address 0x4 - core index']
  #allocation1 [shape = 'u32[144,128]{1,0:T(1,128)}', space=vmem, size = 0x12000, scoped, tag = 'internal scratch']
  %s0 = inlined_call_operand.vmem [shape: bf16[512,128], index: 0, kind: input, shape index: {}]
  %s1 = inlined_call_operand.vmem [shape: bf16[128,128], index: 1, kind: input, shape index: {}]
  %s2 = inlined_call_operand.vmem [shape: f32[1,128], index: 2, kind: input, shape index: {}]
  %s3 = inlined_call_operand.vmem [shape: bf16[128,128], index: 3, kind: input, shape index: {}]
  %s4 = inlined_call_operand.vmem [shape: f32[1,128], index: 4, kind: input, shape index: {}]
  %s5 = inlined_call_operand.vmem [shape: f32[32,128], index: 5, kind: output, shape index: {}]
  %s6 = sld [smem:[#allocation0]]
  $region30: #{transition_down.1} parent=0
    _
  %s8 = ssub.s32 1, %s6
  %s9 = scalar_select 0, %s8, %s6
  // Predicated region
  $region2: #{transition_down.1} parent=0 // pred_check
    _
  $region3: #{transition_down.1} parent=0 // pred_check_branch
    %11 = sbr.rel (0) target = $region5
  $region4: #{transition_down.1} parent=0 // pred_region
    _
  $region5: #{transition_down.1} parent=0 // pred_fallthru
    _
  // Predicated region
  $region6: #{transition_down.1} parent=0 // pred_check
    _
  $region7: #{transition_down.1} parent=0 // pred_check_branch
    %13 = sbr.rel (0) target = $region9
  $region8: #{transition_down.1} parent=0 // pred_region
    _
  $region9: #{transition_down.1} parent=0 // pred_fallthru
    _
  // Predicated region
  $region10: #{transition_down.1} parent=0 // pred_check
    _
  $region11: #{transition_down.1} parent=0 // pred_check_branch
    %15 = sbr.rel (0) target = $region13
  $region12: #{transition_down.1} parent=0 // pred_region
    _
  $region13: #{transition_down.1} parent=0 // pred_fallthru
    _
  // Predicated region
  $region14: #{transition_down.1} parent=0 // pred_check
    _
  $region15: #{transition_down.1} parent=0 // pred_check_branch
    %17 = sbr.rel (0) target = $region17
  $region16: #{transition_down.1} parent=0 // pred_region
    _
  $region17: #{transition_down.1} parent=0 // pred_fallthru
    _
  // Predicated region
  $region18: #{transition_down.1} parent=0 // pred_check
    _
  $region19: #{transition_down.1} parent=0 // pred_check_branch
    %19 = sbr.rel (0) target = $region21
  $region20: #{transition_down.1} parent=0 // pred_region
    _
  $region21: #{transition_down.1} parent=0 // pred_fallthru
    _
  %v21 = vld [vmem:[%s0] sm:$0xf]
  %v22 = vld [vmem:[%s0 + $0x4] sm:$0xf]
  %v23 = vld [vmem:[%s0 + $0x8] sm:$0xf]
  %v24 = vld [vmem:[%s0 + $0xc] sm:$0xf]
  %v25 = vld [vmem:[%s0 + $0x10] sm:$0xf]
  %v26 = vld [vmem:[%s0 + $0x14] sm:$0xf]
  %v27 = vld [vmem:[%s0 + $0x18] sm:$0xf]
  %v28 = vld [vmem:[%s0 + $0x1c] sm:$0xf]
  %v29 = vld [vmem:[%s0 + $0x20] sm:$0xf]
  %v30 = vld [vmem:[%s0 + $0x24] sm:$0xf]
  %v31 = vld [vmem:[%s0 + $0x28] sm:$0xf]
  %v32 = vld [vmem:[%s0 + $0x2c] sm:$0xf]
  %v33 = vld [vmem:[%s0 + $0x30] sm:$0xf]
  %v34 = vld [vmem:[%s0 + $0x34] sm:$0xf]
  %v35 = vld [vmem:[%s0 + $0x38] sm:$0xf]
  %v36 = vld [vmem:[%s0 + $0x3c] sm:$0xf]
  %v37 = vld [vmem:[%s0 + $0x40] sm:$0xf]
  %v38 = vld [vmem:[%s0 + $0x44] sm:$0xf]
  %v39 = vld [vmem:[%s0 + $0x48] sm:$0xf]
  %v40 = vld [vmem:[%s0 + $0x4c] sm:$0xf]
  %v41 = vld [vmem:[%s0 + $0x50] sm:$0xf]
  %v42 = vld [vmem:[%s0 + $0x54] sm:$0xf]
  %v43 = vld [vmem:[%s0 + $0x58] sm:$0xf]
  %v44 = vld [vmem:[%s0 + $0x5c] sm:$0xf]
  %v45 = vld [vmem:[%s0 + $0x60] sm:$0xf]
  %v46 = vld [vmem:[%s0 + $0x64] sm:$0xf]
  %v47 = vld [vmem:[%s0 + $0x68] sm:$0xf]
  %v48 = vld [vmem:[%s0 + $0x6c] sm:$0xf]
  %v49 = vld [vmem:[%s0 + $0x70] sm:$0xf]
  %v50 = vld [vmem:[%s0 + $0x74] sm:$0xf]
  %v51 = vld [vmem:[%s0 + $0x78] sm:$0xf]
  %v52 = vld [vmem:[%s0 + $0x7c] sm:$0xf]
  %v53 = vld [vmem:[%s0 + $0x80] sm:$0xf]
  %v54 = vld [vmem:[%s0 + $0x84] sm:$0xf]
  %v55 = vld [vmem:[%s0 + $0x88] sm:$0xf]
  %v56 = vld [vmem:[%s0 + $0x8c] sm:$0xf]
  %v57 = vld [vmem:[%s0 + $0x90] sm:$0xf]
  %v58 = vld [vmem:[%s0 + $0x94] sm:$0xf]
  %v59 = vld [vmem:[%s0 + $0x98] sm:$0xf]
  %v60 = vld [vmem:[%s0 + $0x9c] sm:$0xf]
  %v61 = vld [vmem:[%s0 + $0xa0] sm:$0xf]
  %v62 = vld [vmem:[%s0 + $0xa4] sm:$0xf]
  %v63 = vld [vmem:[%s0 + $0xa8] sm:$0xf]
  %v64 = vld [vmem:[%s0 + $0xac] sm:$0xf]
  %v65 = vld [vmem:[%s0 + $0xb0] sm:$0xf]
  %v66 = vld [vmem:[%s0 + $0xb4] sm:$0xf]
  %v67 = vld [vmem:[%s0 + $0xb8] sm:$0xf]
  %v68 = vld [vmem:[%s0 + $0xbc] sm:$0xf]
  %v69 = vld [vmem:[%s0 + $0xc0] sm:$0xf]
  %v70 = vld [vmem:[%s0 + $0xc4] sm:$0xf]
  %v71 = vld [vmem:[%s0 + $0xc8] sm:$0xf]
  %v72 = vld [vmem:[%s0 + $0xcc] sm:$0xf]
  %v73 = vld [vmem:[%s0 + $0xd0] sm:$0xf]
  %v74 = vld [vmem:[%s0 + $0xd4] sm:$0xf]
  %v75 = vld [vmem:[%s0 + $0xd8] sm:$0xf]
  %v76 = vld [vmem:[%s0 + $0xdc] sm:$0xf]
  %v77 = vld [vmem:[%s0 + $0xe0] sm:$0xf]
  %v78 = vld [vmem:[%s0 + $0xe4] sm:$0xf]
  %v79 = vld [vmem:[%s0 + $0xe8] sm:$0xf]
  %v80 = vld [vmem:[%s0 + $0xec] sm:$0xf]
  %v81 = vld [vmem:[%s0 + $0xf0] sm:$0xf]
  %v82 = vld [vmem:[%s0 + $0xf4] sm:$0xf]
  %v83 = vld [vmem:[%s0 + $0xf8] sm:$0xf]
  %v84 = vld [vmem:[%s0 + $0xfc] sm:$0xf]
  %v85 = vld [vmem:[%s1] sm:$0xf]
  %v86 = vld [vmem:[%s1 + $0x4] sm:$0xf]
  %v87 = vld [vmem:[%s1 + $0x8] sm:$0xf]
  %v88 = vld [vmem:[%s1 + $0xc] sm:$0xf]
  %v89 = vld [vmem:[%s1 + $0x10] sm:$0xf]
  %v90 = vld [vmem:[%s1 + $0x14] sm:$0xf]
  %v91 = vld [vmem:[%s1 + $0x18] sm:$0xf]
  %v92 = vld [vmem:[%s1 + $0x1c] sm:$0xf]
  %v93 = vld [vmem:[%s1 + $0x20] sm:$0xf]
  %v94 = vld [vmem:[%s1 + $0x24] sm:$0xf]
  %v95 = vld [vmem:[%s1 + $0x28] sm:$0xf]
  %v96 = vld [vmem:[%s1 + $0x2c] sm:$0xf]
  %v97 = vld [vmem:[%s1 + $0x30] sm:$0xf]
  %v98 = vld [vmem:[%s1 + $0x34] sm:$0xf]
  %v99 = vld [vmem:[%s1 + $0x38] sm:$0xf]
  %v100 = vld [vmem:[%s1 + $0x3c] sm:$0xf]
  %v101 = vld [vmem:[%s2] sm:$0x1]
  %v103 = vlaneseq
  %v104 = vshrl.u32 %v103, 7
  %v105 = vsub.s32 0, %v104
  %v106 = vrot.slane %v101, %v105
  %v172 = vunpack.c.l.b16 %v21
  %v173 = vunpack.c.l.b16 %v22
  %v174 = vunpack.c.l.b16 %v23
  %v175 = vunpack.c.l.b16 %v24
  %v176 = vunpack.c.l.b16 %v25
  %v177 = vunpack.c.l.b16 %v26
  %v178 = vunpack.c.l.b16 %v27
  %v179 = vunpack.c.l.b16 %v28
  %v180 = vunpack.c.l.b16 %v29
  %v181 = vunpack.c.l.b16 %v30
  %v182 = vunpack.c.l.b16 %v31
  %v183 = vunpack.c.l.b16 %v32
  %v184 = vunpack.c.l.b16 %v33
  %v185 = vunpack.c.l.b16 %v34
  %v186 = vunpack.c.l.b16 %v35
  %v187 = vunpack.c.l.b16 %v36
  %v188 = vunpack.c.l.b16 %v37
  %v189 = vunpack.c.l.b16 %v38
  %v190 = vunpack.c.l.b16 %v39
  %v191 = vunpack.c.l.b16 %v40
  %v192 = vunpack.c.l.b16 %v41
  %v193 = vunpack.c.l.b16 %v42
  %v194 = vunpack.c.l.b16 %v43
  %v195 = vunpack.c.l.b16 %v44
  %v196 = vunpack.c.l.b16 %v45
  %v197 = vunpack.c.l.b16 %v46
  %v198 = vunpack.c.l.b16 %v47
  %v199 = vunpack.c.l.b16 %v48
  %v200 = vunpack.c.l.b16 %v49
  %v201 = vunpack.c.l.b16 %v50
  %v202 = vunpack.c.l.b16 %v51
  %v203 = vunpack.c.l.b16 %v52
  %v204 = vunpack.c.l.b16 %v53
  %v205 = vunpack.c.l.b16 %v54
  %v206 = vunpack.c.l.b16 %v55
  %v207 = vunpack.c.l.b16 %v56
  %v208 = vunpack.c.l.b16 %v57
  %v209 = vunpack.c.l.b16 %v58
  %v210 = vunpack.c.l.b16 %v59
  %v211 = vunpack.c.l.b16 %v60
  %v212 = vunpack.c.l.b16 %v61
  %v213 = vunpack.c.l.b16 %v62
  %v214 = vunpack.c.l.b16 %v63
  %v215 = vunpack.c.l.b16 %v64
  %v216 = vunpack.c.l.b16 %v65
  %v217 = vunpack.c.l.b16 %v66
  %v218 = vunpack.c.l.b16 %v67
  %v219 = vunpack.c.l.b16 %v68
  %v220 = vunpack.c.l.b16 %v69
  %v221 = vunpack.c.l.b16 %v70
  %v222 = vunpack.c.l.b16 %v71
  %v223 = vunpack.c.l.b16 %v72
  %v224 = vunpack.c.l.b16 %v73
  %v225 = vunpack.c.l.b16 %v74
  %v226 = vunpack.c.l.b16 %v75
  %v227 = vunpack.c.l.b16 %v76
  %v228 = vunpack.c.l.b16 %v77
  %v229 = vunpack.c.l.b16 %v78
  %v230 = vunpack.c.l.b16 %v79
  %v231 = vunpack.c.l.b16 %v80
  %v232 = vunpack.c.l.b16 %v81
  %v233 = vunpack.c.l.b16 %v82
  %v234 = vunpack.c.l.b16 %v83
  %v235 = vunpack.c.l.b16 %v84
  %v236 = vpack.c.b16 %v173, %v172
  %v237 = vpack.c.b16 %v175, %v174
  %v238 = vpack.c.b16 %v177, %v176
  %v239 = vpack.c.b16 %v179, %v178
  %v240 = vpack.c.b16 %v181, %v180
  %v241 = vpack.c.b16 %v183, %v182
  %v242 = vpack.c.b16 %v185, %v184
  %v243 = vpack.c.b16 %v187, %v186
  %v244 = vpack.c.b16 %v189, %v188
  %v245 = vpack.c.b16 %v191, %v190
  %v246 = vpack.c.b16 %v193, %v192
  %v247 = vpack.c.b16 %v195, %v194
  %v248 = vpack.c.b16 %v197, %v196
  %v249 = vpack.c.b16 %v199, %v198
  %v250 = vpack.c.b16 %v201, %v200
  %v251 = vpack.c.b16 %v203, %v202
  %v252 = vpack.c.b16 %v205, %v204
  %v253 = vpack.c.b16 %v207, %v206
  %v254 = vpack.c.b16 %v209, %v208
  %v255 = vpack.c.b16 %v211, %v210
  %v256 = vpack.c.b16 %v213, %v212
  %v257 = vpack.c.b16 %v215, %v214
  %v258 = vpack.c.b16 %v217, %v216
  %v259 = vpack.c.b16 %v219, %v218
  %v260 = vpack.c.b16 %v221, %v220
  %v261 = vpack.c.b16 %v223, %v222
  %v262 = vpack.c.b16 %v225, %v224
  %v263 = vpack.c.b16 %v227, %v226
  %v264 = vpack.c.b16 %v229, %v228
  %v265 = vpack.c.b16 %v231, %v230
  %v266 = vpack.c.b16 %v233, %v232
  %v267 = vpack.c.b16 %v235, %v234
  %v316 = vunpack.c.l.b16 %v85
  %v317 = vunpack.c.l.b16 %v86
  %v318 = vunpack.c.l.b16 %v87
  %v319 = vunpack.c.l.b16 %v88
  %v320 = vunpack.c.l.b16 %v89
  %v321 = vunpack.c.l.b16 %v90
  %v322 = vunpack.c.l.b16 %v91
  %v323 = vunpack.c.l.b16 %v92
  %v324 = vunpack.c.l.b16 %v93
  %v325 = vunpack.c.l.b16 %v94
  %v326 = vunpack.c.l.b16 %v95
  %v327 = vunpack.c.l.b16 %v96
  %v328 = vunpack.c.l.b16 %v97
  %v329 = vunpack.c.l.b16 %v98
  %v330 = vunpack.c.l.b16 %v99
  %v331 = vunpack.c.l.b16 %v100
  %v332 = vpack.c.b16 %v317, %v316
  %v333 = vpack.c.b16 %v319, %v318
  %v334 = vpack.c.b16 %v321, %v320
  %v335 = vpack.c.b16 %v323, %v322
  %v336 = vpack.c.b16 %v325, %v324
  %v337 = vpack.c.b16 %v327, %v326
  %v338 = vpack.c.b16 %v329, %v328
  %v339 = vpack.c.b16 %v331, %v330
  %348 = vmatprep.subr.bf16.mxu0 0
  %349 = vmatpush1.bf16.msra.mxu0 %v339
  %350 = vmatprep.subr.bf16.mxu0 0
  %351 = vmatpush1.bf16.msra.mxu0 %v338
  %352 = vmatprep.subr.bf16.mxu0 0
  %353 = vmatpush1.bf16.msra.mxu0 %v337
  %354 = vmatprep.subr.bf16.mxu0 0
  %355 = vmatpush1.bf16.msra.mxu0 %v336
  %356 = vmatprep.subr.bf16.mxu0 0
  %357 = vmatpush1.bf16.msra.mxu0 %v335
  %358 = vmatprep.subr.bf16.mxu0 0
  %359 = vmatpush1.bf16.msra.mxu0 %v334
  %360 = vmatprep.subr.bf16.mxu0 0
  %361 = vmatpush1.bf16.msra.mxu0 %v333
  %362 = vmatprep.subr.bf16.mxu0 0
  %363 = vmatpush1.bf16.msra.mxu0 %v332
  %364 = vmatprep.subr.bf16.mxu0 0
  %365 = vmatpush2.bf16.msra.mxu0 0
  %366 = vmatprep.subr.bf16.mxu0 0
  %367 = vmatpush2.bf16.msra.mxu0 0
  %368 = vmatprep.subr.bf16.mxu0 0
  %369 = vmatpush2.bf16.msra.mxu0 0
  %370 = vmatprep.subr.bf16.mxu0 0
  %371 = vmatpush2.bf16.msra.mxu0 0
  %372 = vmatprep.subr.bf16.mxu0 0
  %373 = vmatpush2.bf16.msra.mxu0 0
  %374 = vmatprep.subr.bf16.mxu0 0
  %375 = vmatpush2.bf16.msra.mxu0 0
  %376 = vmatprep.subr.bf16.mxu0 0
  %377 = vmatpush2.bf16.msra.mxu0 0
  %378 = vmatprep.subr.bf16.mxu0 0
  %379 = vmatpush2.bf16.msra.mxu0 0
  %380 = vmatprep.mubr.bf16.mxu0 0
  %381 = vmatmul.mubr.bf16.gmra.mxu0 %v236
  %v382 = vpop.f32.mrf.mxu0
  %v383 = vadd.f32 %v106, %v382
  %v384 = vpop.f32.mrf.mxu0
  %v385 = vpop.f32.mrf.mxu0
  %v386 = vadd.f32 %v106, %v385
  %v387 = vpop.f32.mrf.mxu0
  %388 = vmatprep.mubr.bf16.mxu0 0
  %389 = vmatmul.mubr.bf16.gmra.mxu0 %v237
  %v390 = vpop.f32.mrf.mxu0
  %v391 = vadd.f32 %v106, %v390
  %v392 = vpop.f32.mrf.mxu0
  %v393 = vpop.f32.mrf.mxu0
  %v394 = vadd.f32 %v106, %v393
  %v395 = vpop.f32.mrf.mxu0
  %396 = vmatprep.mubr.bf16.mxu0 0
  %397 = vmatmul.mubr.bf16.gmra.mxu0 %v238
  %v398 = vpop.f32.mrf.mxu0
  %v399 = vadd.f32 %v106, %v398
  %v400 = vpop.f32.mrf.mxu0
  %v401 = vpop.f32.mrf.mxu0
  %v402 = vadd.f32 %v106, %v401
  %v403 = vpop.f32.mrf.mxu0
  %404 = vmatprep.mubr.bf16.mxu0 0
  %405 = vmatmul.mubr.bf16.gmra.mxu0 %v239
  %v406 = vpop.f32.mrf.mxu0
  %v407 = vadd.f32 %v106, %v406
  %v408 = vpop.f32.mrf.mxu0
  %v409 = vpop.f32.mrf.mxu0
  %v410 = vadd.f32 %v106, %v409
  %v411 = vpop.f32.mrf.mxu0
  %412 = vmatprep.mubr.bf16.mxu0 0
  %413 = vmatmul.mubr.bf16.gmra.mxu0 %v240
  %v414 = vpop.f32.mrf.mxu0
  %v415 = vadd.f32 %v106, %v414
  %v416 = vpop.f32.mrf.mxu0
  %v417 = vpop.f32.mrf.mxu0
  %v418 = vadd.f32 %v106, %v417
  %v419 = vpop.f32.mrf.mxu0
  %420 = vmatprep.mubr.bf16.mxu0 0
  %421 = vmatmul.mubr.bf16.gmra.mxu0 %v241
  %v422 = vpop.f32.mrf.mxu0
  %v423 = vadd.f32 %v106, %v422
  %v424 = vpop.f32.mrf.mxu0
  %v425 = vpop.f32.mrf.mxu0
  %v426 = vadd.f32 %v106, %v425
  %v427 = vpop.f32.mrf.mxu0
  %428 = vmatprep.mubr.bf16.mxu0 0
  %429 = vmatmul.mubr.bf16.gmra.mxu0 %v242
  %v430 = vpop.f32.mrf.mxu0
  %v431 = vadd.f32 %v106, %v430
  %v432 = vpop.f32.mrf.mxu0
  %v433 = vpop.f32.mrf.mxu0
  %v434 = vadd.f32 %v106, %v433
  %v435 = vpop.f32.mrf.mxu0
  %436 = vmatprep.mubr.bf16.mxu0 0
  %437 = vmatmul.mubr.bf16.gmra.mxu0 %v243
  %v438 = vpop.f32.mrf.mxu0
  %v439 = vadd.f32 %v106, %v438
  %v440 = vpop.f32.mrf.mxu0
  %v441 = vpop.f32.mrf.mxu0
  %v442 = vadd.f32 %v106, %v441
  %v443 = vpop.f32.mrf.mxu0
  %444 = vmatprep.mubr.bf16.mxu0 0
  %445 = vmatmul.mubr.bf16.gmra.mxu0 %v244
  %v446 = vpop.f32.mrf.mxu0
  %v447 = vadd.f32 %v106, %v446
  %v448 = vpop.f32.mrf.mxu0
  %v449 = vpop.f32.mrf.mxu0
  %v450 = vadd.f32 %v106, %v449
  %v451 = vpop.f32.mrf.mxu0
  %452 = vmatprep.mubr.bf16.mxu0 0
  %453 = vmatmul.mubr.bf16.gmra.mxu0 %v245
  %v454 = vpop.f32.mrf.mxu0
  %v455 = vadd.f32 %v106, %v454
  %v456 = vpop.f32.mrf.mxu0
  %v457 = vpop.f32.mrf.mxu0
  %v458 = vadd.f32 %v106, %v457
  %v459 = vpop.f32.mrf.mxu0
  %460 = vmatprep.mubr.bf16.mxu0 0
  %461 = vmatmul.mubr.bf16.gmra.mxu0 %v246
  %v462 = vpop.f32.mrf.mxu0
  %v463 = vadd.f32 %v106, %v462
  %v464 = vpop.f32.mrf.mxu0
  %v465 = vpop.f32.mrf.mxu0
  %v466 = vadd.f32 %v106, %v465
  %v467 = vpop.f32.mrf.mxu0
  %468 = vmatprep.mubr.bf16.mxu0 0
  %469 = vmatmul.mubr.bf16.gmra.mxu0 %v247
  %v470 = vpop.f32.mrf.mxu0
  %v471 = vadd.f32 %v106, %v470
  %v472 = vpop.f32.mrf.mxu0
  %v473 = vpop.f32.mrf.mxu0
  %v474 = vadd.f32 %v106, %v473
  %v475 = vpop.f32.mrf.mxu0
  %476 = vmatprep.mubr.bf16.mxu0 0
  %477 = vmatmul.mubr.bf16.gmra.mxu0 %v248
  %v478 = vpop.f32.mrf.mxu0
  %v479 = vadd.f32 %v106, %v478
  %v480 = vpop.f32.mrf.mxu0
  %v481 = vpop.f32.mrf.mxu0
  %v482 = vadd.f32 %v106, %v481
  %v483 = vpop.f32.mrf.mxu0
  %484 = vmatprep.mubr.bf16.mxu0 0
  %485 = vmatmul.mubr.bf16.gmra.mxu0 %v249
  %v486 = vpop.f32.mrf.mxu0
  %v487 = vadd.f32 %v106, %v486
  %v488 = vpop.f32.mrf.mxu0
  %v489 = vpop.f32.mrf.mxu0
  %v490 = vadd.f32 %v106, %v489
  %v491 = vpop.f32.mrf.mxu0
  %492 = vmatprep.mubr.bf16.mxu0 0
  %493 = vmatmul.mubr.bf16.gmra.mxu0 %v250
  %v494 = vpop.f32.mrf.mxu0
  %v495 = vadd.f32 %v106, %v494
  %v496 = vpop.f32.mrf.mxu0
  %v497 = vpop.f32.mrf.mxu0
  %v498 = vadd.f32 %v106, %v497
  %v499 = vpop.f32.mrf.mxu0
  %500 = vmatprep.mubr.bf16.mxu0 0
  %501 = vmatmul.mubr.bf16.gmra.mxu0 %v251
  %v502 = vpop.f32.mrf.mxu0
  %v503 = vadd.f32 %v106, %v502
  %v504 = vpop.f32.mrf.mxu0
  %v505 = vpop.f32.mrf.mxu0
  %v506 = vadd.f32 %v106, %v505
  %v507 = vpop.f32.mrf.mxu0
  %508 = vmatprep.mubr.bf16.mxu0 0
  %509 = vmatmul.mubr.bf16.gmra.mxu0 %v252
  %v510 = vpop.f32.mrf.mxu0
  %v511 = vadd.f32 %v106, %v510
  %v512 = vpop.f32.mrf.mxu0
  %v513 = vpop.f32.mrf.mxu0
  %v514 = vadd.f32 %v106, %v513
  %v515 = vpop.f32.mrf.mxu0
  %516 = vmatprep.mubr.bf16.mxu0 0
  %517 = vmatmul.mubr.bf16.gmra.mxu0 %v253
  %v518 = vpop.f32.mrf.mxu0
  %v519 = vadd.f32 %v106, %v518
  %v520 = vpop.f32.mrf.mxu0
  %v521 = vpop.f32.mrf.mxu0
  %v522 = vadd.f32 %v106, %v521
  %v523 = vpop.f32.mrf.mxu0
  %524 = vmatprep.mubr.bf16.mxu0 0
  %525 = vmatmul.mubr.bf16.gmra.mxu0 %v254
  %v526 = vpop.f32.mrf.mxu0
  %v527 = vadd.f32 %v106, %v526
  %v528 = vpop.f32.mrf.mxu0
  %v529 = vpop.f32.mrf.mxu0
  %v530 = vadd.f32 %v106, %v529
  %v531 = vpop.f32.mrf.mxu0
  %532 = vmatprep.mubr.bf16.mxu0 0
  %533 = vmatmul.mubr.bf16.gmra.mxu0 %v255
  %v534 = vpop.f32.mrf.mxu0
  %v535 = vadd.f32 %v106, %v534
  %v536 = vpop.f32.mrf.mxu0
  %v537 = vpop.f32.mrf.mxu0
  %v538 = vadd.f32 %v106, %v537
  %v539 = vpop.f32.mrf.mxu0
  %540 = vmatprep.mubr.bf16.mxu0 0
  %541 = vmatmul.mubr.bf16.gmra.mxu0 %v256
  %v542 = vpop.f32.mrf.mxu0
  %v543 = vadd.f32 %v106, %v542
  %v544 = vpop.f32.mrf.mxu0
  %v545 = vpop.f32.mrf.mxu0
  %v546 = vadd.f32 %v106, %v545
  %v547 = vpop.f32.mrf.mxu0
  %548 = vmatprep.mubr.bf16.mxu0 0
  %549 = vmatmul.mubr.bf16.gmra.mxu0 %v257
  %v550 = vpop.f32.mrf.mxu0
  %v551 = vadd.f32 %v106, %v550
  %v552 = vpop.f32.mrf.mxu0
  %v553 = vpop.f32.mrf.mxu0
  %v554 = vadd.f32 %v106, %v553
  %v555 = vpop.f32.mrf.mxu0
  %556 = vmatprep.mubr.bf16.mxu0 0
  %557 = vmatmul.mubr.bf16.gmra.mxu0 %v258
  %v558 = vpop.f32.mrf.mxu0
  %v559 = vadd.f32 %v106, %v558
  %v560 = vpop.f32.mrf.mxu0
  %v561 = vpop.f32.mrf.mxu0
  %v562 = vadd.f32 %v106, %v561
  %v563 = vpop.f32.mrf.mxu0
  %564 = vmatprep.mubr.bf16.mxu0 0
  %565 = vmatmul.mubr.bf16.gmra.mxu0 %v259
  %v566 = vpop.f32.mrf.mxu0
  %v567 = vadd.f32 %v106, %v566
  %v568 = vpop.f32.mrf.mxu0
  %v569 = vpop.f32.mrf.mxu0
  %v570 = vadd.f32 %v106, %v569
  %v571 = vpop.f32.mrf.mxu0
  %572 = vmatprep.mubr.bf16.mxu0 0
  %573 = vmatmul.mubr.bf16.gmra.mxu0 %v260
  %v574 = vpop.f32.mrf.mxu0
  %v575 = vadd.f32 %v106, %v574
  %v576 = vpop.f32.mrf.mxu0
  %v577 = vpop.f32.mrf.mxu0
  %v578 = vadd.f32 %v106, %v577
  %v579 = vpop.f32.mrf.mxu0
  %580 = vmatprep.mubr.bf16.mxu0 0
  %581 = vmatmul.mubr.bf16.gmra.mxu0 %v261
  %v582 = vpop.f32.mrf.mxu0
  %v583 = vadd.f32 %v106, %v582
  %v584 = vpop.f32.mrf.mxu0
  %v585 = vpop.f32.mrf.mxu0
  %v586 = vadd.f32 %v106, %v585
  %v587 = vpop.f32.mrf.mxu0
  %588 = vmatprep.mubr.bf16.mxu0 0
  %589 = vmatmul.mubr.bf16.gmra.mxu0 %v262
  %v590 = vpop.f32.mrf.mxu0
  %v591 = vadd.f32 %v106, %v590
  %v592 = vpop.f32.mrf.mxu0
  %v593 = vpop.f32.mrf.mxu0
  %v594 = vadd.f32 %v106, %v593
  %v595 = vpop.f32.mrf.mxu0
  %596 = vmatprep.mubr.bf16.mxu0 0
  %597 = vmatmul.mubr.bf16.gmra.mxu0 %v263
  %v598 = vpop.f32.mrf.mxu0
  %v599 = vadd.f32 %v106, %v598
  %v600 = vpop.f32.mrf.mxu0
  %v601 = vpop.f32.mrf.mxu0
  %v602 = vadd.f32 %v106, %v601
  %v603 = vpop.f32.mrf.mxu0
  %604 = vmatprep.mubr.bf16.mxu0 0
  %605 = vmatmul.mubr.bf16.gmra.mxu0 %v264
  %v606 = vpop.f32.mrf.mxu0
  %v607 = vadd.f32 %v106, %v606
  %v608 = vpop.f32.mrf.mxu0
  %v609 = vpop.f32.mrf.mxu0
  %v610 = vadd.f32 %v106, %v609
  %v611 = vpop.f32.mrf.mxu0
  %612 = vmatprep.mubr.bf16.mxu0 0
  %613 = vmatmul.mubr.bf16.gmra.mxu0 %v265
  %v614 = vpop.f32.mrf.mxu0
  %v615 = vadd.f32 %v106, %v614
  %v616 = vpop.f32.mrf.mxu0
  %v617 = vpop.f32.mrf.mxu0
  %v618 = vadd.f32 %v106, %v617
  %v619 = vpop.f32.mrf.mxu0
  %620 = vmatprep.mubr.bf16.mxu0 0
  %621 = vmatmul.mubr.bf16.gmra.mxu0 %v266
  %v622 = vpop.f32.mrf.mxu0
  %v623 = vadd.f32 %v106, %v622
  %v624 = vpop.f32.mrf.mxu0
  %v625 = vpop.f32.mrf.mxu0
  %v626 = vadd.f32 %v106, %v625
  %v627 = vpop.f32.mrf.mxu0
  %628 = vmatprep.mubr.bf16.mxu0 0
  %629 = vmatmul.mubr.bf16.gmra.mxu0 %v267
  %v630 = vpop.f32.mrf.mxu0
  %v631 = vadd.f32 %v106, %v630
  %v632 = vpop.f32.mrf.mxu0
  %v633 = vpop.f32.mrf.mxu0
  %v634 = vadd.f32 %v106, %v633
  %v635 = vpop.f32.mrf.mxu0
  %636 = vdwg.mxu0
  %v637 = vmax.f32 %v383, 0.0
  %v638 = vmax.f32 %v386, 0.0
  %v639 = vmax.f32 %v391, 0.0
  %v640 = vmax.f32 %v394, 0.0
  %v641 = vmax.f32 %v399, 0.0
  %v642 = vmax.f32 %v402, 0.0
  %v643 = vmax.f32 %v407, 0.0
  %v644 = vmax.f32 %v410, 0.0
  %v645 = vmax.f32 %v415, 0.0
  %v646 = vmax.f32 %v418, 0.0
  %v647 = vmax.f32 %v423, 0.0
  %v648 = vmax.f32 %v426, 0.0
  %v649 = vmax.f32 %v431, 0.0
  %v650 = vmax.f32 %v434, 0.0
  %v651 = vmax.f32 %v439, 0.0
  %v652 = vmax.f32 %v442, 0.0
  %v653 = vmax.f32 %v447, 0.0
  %v654 = vmax.f32 %v450, 0.0
  %v655 = vmax.f32 %v455, 0.0
  %v656 = vmax.f32 %v458, 0.0
  %v657 = vmax.f32 %v463, 0.0
  %v658 = vmax.f32 %v466, 0.0
  %v659 = vmax.f32 %v471, 0.0
  %v660 = vmax.f32 %v474, 0.0
  %v661 = vmax.f32 %v479, 0.0
  %v662 = vmax.f32 %v482, 0.0
  %v663 = vmax.f32 %v487, 0.0
  %v664 = vmax.f32 %v490, 0.0
  %v665 = vmax.f32 %v495, 0.0
  %v666 = vmax.f32 %v498, 0.0
  %v667 = vmax.f32 %v503, 0.0
  %v668 = vmax.f32 %v506, 0.0
  %v669 = vmax.f32 %v511, 0.0
  %v670 = vmax.f32 %v514, 0.0
  %v671 = vmax.f32 %v519, 0.0
  %v672 = vmax.f32 %v522, 0.0
  %v673 = vmax.f32 %v527, 0.0
  %v674 = vmax.f32 %v530, 0.0
  %v675 = vmax.f32 %v535, 0.0
  %v676 = vmax.f32 %v538, 0.0
  %v677 = vmax.f32 %v543, 0.0
  %v678 = vmax.f32 %v546, 0.0
  %v679 = vmax.f32 %v551, 0.0
  %v680 = vmax.f32 %v554, 0.0
  %v681 = vmax.f32 %v559, 0.0
  %v682 = vmax.f32 %v562, 0.0
  %v683 = vmax.f32 %v567, 0.0
  %v684 = vmax.f32 %v570, 0.0
  %v685 = vmax.f32 %v575, 0.0
  %v686 = vmax.f32 %v578, 0.0
  %v687 = vmax.f32 %v583, 0.0
  %v688 = vmax.f32 %v586, 0.0
  %v689 = vmax.f32 %v591, 0.0
  %v690 = vmax.f32 %v594, 0.0
  %v691 = vmax.f32 %v599, 0.0
  %v692 = vmax.f32 %v602, 0.0
  %v693 = vmax.f32 %v607, 0.0
  %v694 = vmax.f32 %v610, 0.0
  %v695 = vmax.f32 %v615, 0.0
  %v696 = vmax.f32 %v618, 0.0
  %v697 = vmax.f32 %v623, 0.0
  %v698 = vmax.f32 %v626, 0.0
  %v699 = vmax.f32 %v631, 0.0
  %v700 = vmax.f32 %v634, 0.0
  %v701 = vpack.c.bf16 %v638, %v637
  %v702 = vpack.c.bf16 %v640, %v639
  %v703 = vpack.c.bf16 %v642, %v641
  %v704 = vpack.c.bf16 %v644, %v643
  %v705 = vpack.c.bf16 %v646, %v645
  %v706 = vpack.c.bf16 %v648, %v647
  %v707 = vpack.c.bf16 %v650, %v649
  %v708 = vpack.c.bf16 %v652, %v651
  %v709 = vpack.c.bf16 %v654, %v653
  %v710 = vpack.c.bf16 %v656, %v655
  %v711 = vpack.c.bf16 %v658, %v657
  %v712 = vpack.c.bf16 %v660, %v659
  %v713 = vpack.c.bf16 %v662, %v661
  %v714 = vpack.c.bf16 %v664, %v663
  %v715 = vpack.c.bf16 %v666, %v665
  %v716 = vpack.c.bf16 %v668, %v667
  %v717 = vpack.c.bf16 %v670, %v669
  %v718 = vpack.c.bf16 %v672, %v671
  %v719 = vpack.c.bf16 %v674, %v673
  %v720 = vpack.c.bf16 %v676, %v675
  %v721 = vpack.c.bf16 %v678, %v677
  %v722 = vpack.c.bf16 %v680, %v679
  %v723 = vpack.c.bf16 %v682, %v681
  %v724 = vpack.c.bf16 %v684, %v683
  %v725 = vpack.c.bf16 %v686, %v685
  %v726 = vpack.c.bf16 %v688, %v687
  %v727 = vpack.c.bf16 %v690, %v689
  %v728 = vpack.c.bf16 %v692, %v691
  %v729 = vpack.c.bf16 %v694, %v693
  %v730 = vpack.c.bf16 %v696, %v695
  %v731 = vpack.c.bf16 %v698, %v697
  %v732 = vpack.c.bf16 %v700, %v699
  %v733 = vld [vmem:[%s3] sm:$0xf]
  %v734 = vld [vmem:[%s3 + $0x4] sm:$0xf]
  %v735 = vld [vmem:[%s3 + $0x8] sm:$0xf]
  %v736 = vld [vmem:[%s3 + $0xc] sm:$0xf]
  %v737 = vld [vmem:[%s3 + $0x10] sm:$0xf]
  %v738 = vld [vmem:[%s3 + $0x14] sm:$0xf]
  %v739 = vld [vmem:[%s3 + $0x18] sm:$0xf]
  %v740 = vld [vmem:[%s3 + $0x1c] sm:$0xf]
  %v741 = vld [vmem:[%s3 + $0x20] sm:$0xf]
  %v742 = vld [vmem:[%s3 + $0x24] sm:$0xf]
  %v743 = vld [vmem:[%s3 + $0x28] sm:$0xf]
  %v744 = vld [vmem:[%s3 + $0x2c] sm:$0xf]
  %v745 = vld [vmem:[%s3 + $0x30] sm:$0xf]
  %v746 = vld [vmem:[%s3 + $0x34] sm:$0xf]
  %v747 = vld [vmem:[%s3 + $0x38] sm:$0xf]
  %v748 = vld [vmem:[%s3 + $0x3c] sm:$0xf]
  %v749 = vld [vmem:[%s4] sm:$0x1]
  %v751 = vlaneseq
  %v752 = vshrl.u32 %v751, 7
  %v753 = vsub.s32 0, %v752
  %v754 = vrot.slane %v749, %v753
  %v772 = vunpack.c.l.b16 %v733
  %v773 = vunpack.c.l.b16 %v734
  %v774 = vunpack.c.l.b16 %v735
  %v775 = vunpack.c.l.b16 %v736
  %v776 = vunpack.c.l.b16 %v737
  %v777 = vunpack.c.l.b16 %v738
  %v778 = vunpack.c.l.b16 %v739
  %v779 = vunpack.c.l.b16 %v740
  %v780 = vunpack.c.l.b16 %v741
  %v781 = vunpack.c.l.b16 %v742
  %v782 = vunpack.c.l.b16 %v743
  %v783 = vunpack.c.l.b16 %v744
  %v784 = vunpack.c.l.b16 %v745
  %v785 = vunpack.c.l.b16 %v746
  %v786 = vunpack.c.l.b16 %v747
  %v787 = vunpack.c.l.b16 %v748
  %v788 = vpack.c.b16 %v773, %v772
  %v789 = vpack.c.b16 %v775, %v774
  %v790 = vpack.c.b16 %v777, %v776
  %v791 = vpack.c.b16 %v779, %v778
  %v792 = vpack.c.b16 %v781, %v780
  %v793 = vpack.c.b16 %v783, %v782
  %v794 = vpack.c.b16 %v785, %v784
  %v795 = vpack.c.b16 %v787, %v786
  %804 = vmatprep.subr.bf16.mxu0 0
  %805 = vmatpush1.bf16.msra.mxu0 %v795
  %806 = vmatprep.subr.bf16.mxu0 0
  %807 = vmatpush1.bf16.msra.mxu0 %v794
  %808 = vmatprep.subr.bf16.mxu0 0
  %809 = vmatpush1.bf16.msra.mxu0 %v793
  %810 = vmatprep.subr.bf16.mxu0 0
  %811 = vmatpush1.bf16.msra.mxu0 %v792
  %812 = vmatprep.subr.bf16.mxu0 0
  %813 = vmatpush1.bf16.msra.mxu0 %v791
  %814 = vmatprep.subr.bf16.mxu0 0
  %815 = vmatpush1.bf16.msra.mxu0 %v790
  %816 = vmatprep.subr.bf16.mxu0 0
  %817 = vmatpush1.bf16.msra.mxu0 %v789
  %818 = vmatprep.subr.bf16.mxu0 0
  %819 = vmatpush1.bf16.msra.mxu0 %v788
  %820 = vmatprep.subr.bf16.mxu0 0
  %821 = vmatpush2.bf16.msra.mxu0 0
  %822 = vmatprep.subr.bf16.mxu0 0
  %823 = vmatpush2.bf16.msra.mxu0 0
  %824 = vmatprep.subr.bf16.mxu0 0
  %825 = vmatpush2.bf16.msra.mxu0 0
  %826 = vmatprep.subr.bf16.mxu0 0
  %827 = vmatpush2.bf16.msra.mxu0 0
  %828 = vmatprep.subr.bf16.mxu0 0
  %829 = vmatpush2.bf16.msra.mxu0 0
  %830 = vmatprep.subr.bf16.mxu0 0
  %831 = vmatpush2.bf16.msra.mxu0 0
  %832 = vmatprep.subr.bf16.mxu0 0
  %833 = vmatpush2.bf16.msra.mxu0 0
  %834 = vmatprep.subr.bf16.mxu0 0
  %835 = vmatpush2.bf16.msra.mxu0 0
  %836 = vmatprep.mubr.bf16.mxu0 0
  %837 = vmatmul.mubr.bf16.gmra.mxu0 %v701
  %v838 = vpop.f32.mrf.mxu0
  %v839 = vadd.f32 %v754, %v838
  %v840 = vpop.f32.mrf.mxu0
  %v841 = vpop.f32.mrf.mxu0
  %v842 = vadd.f32 %v754, %v841
  %v843 = vpop.f32.mrf.mxu0
  %844 = vmatprep.mubr.bf16.mxu0 0
  %845 = vmatmul.mubr.bf16.gmra.mxu0 %v702
  %v846 = vpop.f32.mrf.mxu0
  %v847 = vadd.f32 %v754, %v846
  %v848 = vpop.f32.mrf.mxu0
  %v849 = vpop.f32.mrf.mxu0
  %v850 = vadd.f32 %v754, %v849
  %v851 = vpop.f32.mrf.mxu0
  %852 = vmatprep.mubr.bf16.mxu0 0
  %853 = vmatmul.mubr.bf16.gmra.mxu0 %v703
  %v854 = vpop.f32.mrf.mxu0
  %v855 = vadd.f32 %v754, %v854
  %v856 = vpop.f32.mrf.mxu0
  %v857 = vpop.f32.mrf.mxu0
  %v858 = vadd.f32 %v754, %v857
  %v859 = vpop.f32.mrf.mxu0
  %860 = vmatprep.mubr.bf16.mxu0 0
  %861 = vmatmul.mubr.bf16.gmra.mxu0 %v704
  %v862 = vpop.f32.mrf.mxu0
  %v863 = vadd.f32 %v754, %v862
  %v864 = vpop.f32.mrf.mxu0
  %v865 = vpop.f32.mrf.mxu0
  %v866 = vadd.f32 %v754, %v865
  %v867 = vpop.f32.mrf.mxu0
  %868 = vmatprep.mubr.bf16.mxu0 0
  %869 = vmatmul.mubr.bf16.gmra.mxu0 %v705
  %v870 = vpop.f32.mrf.mxu0
  %v871 = vadd.f32 %v754, %v870
  %v872 = vpop.f32.mrf.mxu0
  %v873 = vpop.f32.mrf.mxu0
  %v874 = vadd.f32 %v754, %v873
  %v875 = vpop.f32.mrf.mxu0
  %876 = vmatprep.mubr.bf16.mxu0 0
  %877 = vmatmul.mubr.bf16.gmra.mxu0 %v706
  %v878 = vpop.f32.mrf.mxu0
  %v879 = vadd.f32 %v754, %v878
  %v880 = vpop.f32.mrf.mxu0
  %v881 = vpop.f32.mrf.mxu0
  %v882 = vadd.f32 %v754, %v881
  %v883 = vpop.f32.mrf.mxu0
  %884 = vmatprep.mubr.bf16.mxu0 0
  %885 = vmatmul.mubr.bf16.gmra.mxu0 %v707
  %v886 = vpop.f32.mrf.mxu0
  %v887 = vadd.f32 %v754, %v886
  %v888 = vpop.f32.mrf.mxu0
  %v889 = vpop.f32.mrf.mxu0
  %v890 = vadd.f32 %v754, %v889
  %v891 = vpop.f32.mrf.mxu0
  %892 = vmatprep.mubr.bf16.mxu0 0
  %893 = vmatmul.mubr.bf16.gmra.mxu0 %v708
  %v894 = vpop.f32.mrf.mxu0
  %v895 = vadd.f32 %v754, %v894
  %v896 = vpop.f32.mrf.mxu0
  %v897 = vpop.f32.mrf.mxu0
  %v898 = vadd.f32 %v754, %v897
  %v899 = vpop.f32.mrf.mxu0
  %900 = vmatprep.mubr.bf16.mxu0 0
  %901 = vmatmul.mubr.bf16.gmra.mxu0 %v709
  %v902 = vpop.f32.mrf.mxu0
  %v903 = vadd.f32 %v754, %v902
  %v904 = vpop.f32.mrf.mxu0
  %v905 = vpop.f32.mrf.mxu0
  %v906 = vadd.f32 %v754, %v905
  %v907 = vpop.f32.mrf.mxu0
  %908 = vmatprep.mubr.bf16.mxu0 0
  %909 = vmatmul.mubr.bf16.gmra.mxu0 %v710
  %v910 = vpop.f32.mrf.mxu0
  %v911 = vadd.f32 %v754, %v910
  %v912 = vpop.f32.mrf.mxu0
  %v913 = vpop.f32.mrf.mxu0
  %v914 = vadd.f32 %v754, %v913
  %v915 = vpop.f32.mrf.mxu0
  %916 = vmatprep.mubr.bf16.mxu0 0
  %917 = vmatmul.mubr.bf16.gmra.mxu0 %v711
  %v918 = vpop.f32.mrf.mxu0
  %v919 = vadd.f32 %v754, %v918
  %v920 = vpop.f32.mrf.mxu0
  %v921 = vpop.f32.mrf.mxu0
  %v922 = vadd.f32 %v754, %v921
  %v923 = vpop.f32.mrf.mxu0
  %924 = vmatprep.mubr.bf16.mxu0 0
  %925 = vmatmul.mubr.bf16.gmra.mxu0 %v712
  %v926 = vpop.f32.mrf.mxu0
  %v927 = vadd.f32 %v754, %v926
  %v928 = vpop.f32.mrf.mxu0
  %v929 = vpop.f32.mrf.mxu0
  %v930 = vadd.f32 %v754, %v929
  %v931 = vpop.f32.mrf.mxu0
  %932 = vmatprep.mubr.bf16.mxu0 0
  %933 = vmatmul.mubr.bf16.gmra.mxu0 %v713
  %v934 = vpop.f32.mrf.mxu0
  %v935 = vadd.f32 %v754, %v934
  %v936 = vpop.f32.mrf.mxu0
  %v937 = vpop.f32.mrf.mxu0
  %v938 = vadd.f32 %v754, %v937
  %v939 = vpop.f32.mrf.mxu0
  %940 = vmatprep.mubr.bf16.mxu0 0
  %941 = vmatmul.mubr.bf16.gmra.mxu0 %v714
  %v942 = vpop.f32.mrf.mxu0
  %v943 = vadd.f32 %v754, %v942
  %v944 = vpop.f32.mrf.mxu0
  %v945 = vpop.f32.mrf.mxu0
  %v946 = vadd.f32 %v754, %v945
  %v947 = vpop.f32.mrf.mxu0
  %948 = vmatprep.mubr.bf16.mxu0 0
  %949 = vmatmul.mubr.bf16.gmra.mxu0 %v715
  %v950 = vpop.f32.mrf.mxu0
  %v951 = vadd.f32 %v754, %v950
  %v952 = vpop.f32.mrf.mxu0
  %v953 = vpop.f32.mrf.mxu0
  %v954 = vadd.f32 %v754, %v953
  %v955 = vpop.f32.mrf.mxu0
  %956 = vmatprep.mubr.bf16.mxu0 0
  %957 = vmatmul.mubr.bf16.gmra.mxu0 %v716
  %v958 = vpop.f32.mrf.mxu0
  %v959 = vadd.f32 %v754, %v958
  %v960 = vpop.f32.mrf.mxu0
  %v961 = vpop.f32.mrf.mxu0
  %v962 = vadd.f32 %v754, %v961
  %v963 = vpop.f32.mrf.mxu0
  %964 = vmatprep.mubr.bf16.mxu0 0
  %965 = vmatmul.mubr.bf16.gmra.mxu0 %v717
  %v966 = vpop.f32.mrf.mxu0
  %v967 = vadd.f32 %v754, %v966
  %v968 = vpop.f32.mrf.mxu0
  %v969 = vpop.f32.mrf.mxu0
  %v970 = vadd.f32 %v754, %v969
  %v971 = vpop.f32.mrf.mxu0
  %972 = vmatprep.mubr.bf16.mxu0 0
  %973 = vmatmul.mubr.bf16.gmra.mxu0 %v718
  %v974 = vpop.f32.mrf.mxu0
  %v975 = vadd.f32 %v754, %v974
  %v976 = vpop.f32.mrf.mxu0
  %v977 = vpop.f32.mrf.mxu0
  %v978 = vadd.f32 %v754, %v977
  %v979 = vpop.f32.mrf.mxu0
  %980 = vmatprep.mubr.bf16.mxu0 0
  %981 = vmatmul.mubr.bf16.gmra.mxu0 %v719
  %v982 = vpop.f32.mrf.mxu0
  %v983 = vadd.f32 %v754, %v982
  %v984 = vpop.f32.mrf.mxu0
  %v985 = vpop.f32.mrf.mxu0
  %v986 = vadd.f32 %v754, %v985
  %v987 = vpop.f32.mrf.mxu0
  %988 = vmatprep.mubr.bf16.mxu0 0
  %989 = vmatmul.mubr.bf16.gmra.mxu0 %v720
  %v990 = vpop.f32.mrf.mxu0
  %v991 = vadd.f32 %v754, %v990
  %v992 = vpop.f32.mrf.mxu0
  %v993 = vpop.f32.mrf.mxu0
  %v994 = vadd.f32 %v754, %v993
  %v995 = vpop.f32.mrf.mxu0
  %996 = vmatprep.mubr.bf16.mxu0 0
  %997 = vmatmul.mubr.bf16.gmra.mxu0 %v721
  %v998 = vpop.f32.mrf.mxu0
  %v999 = vadd.f32 %v754, %v998
  %v1000 = vpop.f32.mrf.mxu0
  %v1001 = vpop.f32.mrf.mxu0
  %v1002 = vadd.f32 %v754, %v1001
  %v1003 = vpop.f32.mrf.mxu0
  %1004 = vmatprep.mubr.bf16.mxu0 0
  %1005 = vmatmul.mubr.bf16.gmra.mxu0 %v722
  %v1006 = vpop.f32.mrf.mxu0
  %v1007 = vadd.f32 %v754, %v1006
  %v1008 = vpop.f32.mrf.mxu0
  %v1009 = vpop.f32.mrf.mxu0
  %v1010 = vadd.f32 %v754, %v1009
  %v1011 = vpop.f32.mrf.mxu0
  %1012 = vmatprep.mubr.bf16.mxu0 0
  %1013 = vmatmul.mubr.bf16.gmra.mxu0 %v723
  %v1014 = vpop.f32.mrf.mxu0
  %v1015 = vadd.f32 %v754, %v1014
  %v1016 = vpop.f32.mrf.mxu0
  %v1017 = vpop.f32.mrf.mxu0
  %v1018 = vadd.f32 %v754, %v1017
  %v1019 = vpop.f32.mrf.mxu0
  %1020 = vmatprep.mubr.bf16.mxu0 0
  %1021 = vmatmul.mubr.bf16.gmra.mxu0 %v724
  %v1022 = vpop.f32.mrf.mxu0
  %v1023 = vadd.f32 %v754, %v1022
  %v1024 = vpop.f32.mrf.mxu0
  %v1025 = vpop.f32.mrf.mxu0
  %v1026 = vadd.f32 %v754, %v1025
  %v1027 = vpop.f32.mrf.mxu0
  %1028 = vmatprep.mubr.bf16.mxu0 0
  %1029 = vmatmul.mubr.bf16.gmra.mxu0 %v725
  %v1030 = vpop.f32.mrf.mxu0
  %v1031 = vadd.f32 %v754, %v1030
  %v1032 = vpop.f32.mrf.mxu0
  %v1033 = vpop.f32.mrf.mxu0
  %v1034 = vadd.f32 %v754, %v1033
  %v1035 = vpop.f32.mrf.mxu0
  %1036 = vmatprep.mubr.bf16.mxu0 0
  %1037 = vmatmul.mubr.bf16.gmra.mxu0 %v726
  %v1038 = vpop.f32.mrf.mxu0
  %v1039 = vadd.f32 %v754, %v1038
  %v1040 = vpop.f32.mrf.mxu0
  %v1041 = vpop.f32.mrf.mxu0
  %v1042 = vadd.f32 %v754, %v1041
  %v1043 = vpop.f32.mrf.mxu0
  %1044 = vmatprep.mubr.bf16.mxu0 0
  %1045 = vmatmul.mubr.bf16.gmra.mxu0 %v727
  %v1046 = vpop.f32.mrf.mxu0
  %v1047 = vadd.f32 %v754, %v1046
  %v1048 = vpop.f32.mrf.mxu0
  %v1049 = vpop.f32.mrf.mxu0
  %v1050 = vadd.f32 %v754, %v1049
  %v1051 = vpop.f32.mrf.mxu0
  %1052 = vmatprep.mubr.bf16.mxu0 0
  %1053 = vmatmul.mubr.bf16.gmra.mxu0 %v728
  %v1054 = vpop.f32.mrf.mxu0
  %v1055 = vadd.f32 %v754, %v1054
  %v1056 = vpop.f32.mrf.mxu0
  %v1057 = vpop.f32.mrf.mxu0
  %v1058 = vadd.f32 %v754, %v1057
  %v1059 = vpop.f32.mrf.mxu0
  %1060 = vmatprep.mubr.bf16.mxu0 0
  %1061 = vmatmul.mubr.bf16.gmra.mxu0 %v729
  %v1062 = vpop.f32.mrf.mxu0
  %v1063 = vadd.f32 %v754, %v1062
  %v1064 = vpop.f32.mrf.mxu0
  %v1065 = vpop.f32.mrf.mxu0
  %v1066 = vadd.f32 %v754, %v1065
  %v1067 = vpop.f32.mrf.mxu0
  %1068 = vmatprep.mubr.bf16.mxu0 0
  %1069 = vmatmul.mubr.bf16.gmra.mxu0 %v730
  %v1070 = vpop.f32.mrf.mxu0
  %v1071 = vadd.f32 %v754, %v1070
  %v1072 = vpop.f32.mrf.mxu0
  %v1073 = vpop.f32.mrf.mxu0
  %v1074 = vadd.f32 %v754, %v1073
  %v1075 = vpop.f32.mrf.mxu0
  %1076 = vmatprep.mubr.bf16.mxu0 0
  %1077 = vmatmul.mubr.bf16.gmra.mxu0 %v731
  %v1078 = vpop.f32.mrf.mxu0
  %v1079 = vadd.f32 %v754, %v1078
  %v1080 = vpop.f32.mrf.mxu0
  %v1081 = vpop.f32.mrf.mxu0
  %v1082 = vadd.f32 %v754, %v1081
  %v1083 = vpop.f32.mrf.mxu0
  %1084 = vmatprep.mubr.bf16.mxu0 0
  %1085 = vmatmul.mubr.bf16.gmra.mxu0 %v732
  %v1086 = vpop.f32.mrf.mxu0
  %v1087 = vadd.f32 %v754, %v1086
  %v1088 = vpop.f32.mrf.mxu0
  %v1089 = vpop.f32.mrf.mxu0
  %v1090 = vadd.f32 %v754, %v1089
  %v1091 = vpop.f32.mrf.mxu0
  %1092 = vdwg.mxu0
  %v1093 = vmax.f32 %v839, 0.0
  %v1094 = vmax.f32 %v842, 0.0
  %v1095 = vmax.f32 %v847, 0.0
  %v1096 = vmax.f32 %v850, 0.0
  %v1097 = vmax.f32 %v855, 0.0
  %v1098 = vmax.f32 %v858, 0.0
  %v1099 = vmax.f32 %v863, 0.0
  %v1100 = vmax.f32 %v866, 0.0
  %v1101 = vmax.f32 %v871, 0.0
  %v1102 = vmax.f32 %v874, 0.0
  %v1103 = vmax.f32 %v879, 0.0
  %v1104 = vmax.f32 %v882, 0.0
  %v1105 = vmax.f32 %v887, 0.0
  %v1106 = vmax.f32 %v890, 0.0
  %v1107 = vmax.f32 %v895, 0.0
  %v1108 = vmax.f32 %v898, 0.0
  %v1109 = vmax.f32 %v903, 0.0
  %v1110 = vmax.f32 %v906, 0.0
  %v1111 = vmax.f32 %v911, 0.0
  %v1112 = vmax.f32 %v914, 0.0
  %v1113 = vmax.f32 %v919, 0.0
  %v1114 = vmax.f32 %v922, 0.0
  %v1115 = vmax.f32 %v927, 0.0
  %v1116 = vmax.f32 %v930, 0.0
  %v1117 = vmax.f32 %v935, 0.0
  %v1118 = vmax.f32 %v938, 0.0
  %v1119 = vmax.f32 %v943, 0.0
  %v1120 = vmax.f32 %v946, 0.0
  %v1121 = vmax.f32 %v951, 0.0
  %v1122 = vmax.f32 %v954, 0.0
  %v1123 = vmax.f32 %v959, 0.0
  %v1124 = vmax.f32 %v962, 0.0
  %v1125 = vmax.f32 %v967, 0.0
  %v1126 = vmax.f32 %v970, 0.0
  %v1127 = vmax.f32 %v975, 0.0
  %v1128 = vmax.f32 %v978, 0.0
  %v1129 = vmax.f32 %v983, 0.0
  %v1130 = vmax.f32 %v986, 0.0
  %v1131 = vmax.f32 %v991, 0.0
  %v1132 = vmax.f32 %v994, 0.0
  %v1133 = vmax.f32 %v999, 0.0
  %v1134 = vmax.f32 %v1002, 0.0
  %v1135 = vmax.f32 %v1007, 0.0
  %v1136 = vmax.f32 %v1010, 0.0
  %v1137 = vmax.f32 %v1015, 0.0
  %v1138 = vmax.f32 %v1018, 0.0
  %v1139 = vmax.f32 %v1023, 0.0
  %v1140 = vmax.f32 %v1026, 0.0
  %v1141 = vmax.f32 %v1031, 0.0
  %v1142 = vmax.f32 %v1034, 0.0
  %v1143 = vmax.f32 %v1039, 0.0
  %v1144 = vmax.f32 %v1042, 0.0
  %v1145 = vmax.f32 %v1047, 0.0
  %v1146 = vmax.f32 %v1050, 0.0
  %v1147 = vmax.f32 %v1055, 0.0
  %v1148 = vmax.f32 %v1058, 0.0
  %v1149 = vmax.f32 %v1063, 0.0
  %v1150 = vmax.f32 %v1066, 0.0
  %v1151 = vmax.f32 %v1071, 0.0
  %v1152 = vmax.f32 %v1074, 0.0
  %v1153 = vmax.f32 %v1079, 0.0
  %v1154 = vmax.f32 %v1082, 0.0
  %v1155 = vmax.f32 %v1087, 0.0
  %v1156 = vmax.f32 %v1090, 0.0
  %v1157 = vmax.f32 %v1093, %v1094
  %v1158 = vrot.slane %v1157, 4
  %v1159 = vmax.f32 %v1157, %v1158
  %v1160 = vrot.slane %v1159, 2
  %v1161 = vmax.f32 %v1159, %v1160
  %v1162 = vrot.slane %v1161, 1
  %v1163 = vmax.f32 %v1161, %v1162
  %v1164 = vmax.f32 %v1095, %v1096
  %v1165 = vrot.slane %v1164, 4
  %v1166 = vmax.f32 %v1164, %v1165
  %v1167 = vrot.slane %v1166, 2
  %v1168 = vmax.f32 %v1166, %v1167
  %v1169 = vrot.slane %v1168, 1
  %v1170 = vmax.f32 %v1168, %v1169
  %v1171 = vmax.f32 %v1097, %v1098
  %v1172 = vrot.slane %v1171, 4
  %v1173 = vmax.f32 %v1171, %v1172
  %v1174 = vrot.slane %v1173, 2
  %v1175 = vmax.f32 %v1173, %v1174
  %v1176 = vrot.slane %v1175, 1
  %v1177 = vmax.f32 %v1175, %v1176
  %v1178 = vmax.f32 %v1099, %v1100
  %v1179 = vrot.slane %v1178, 4
  %v1180 = vmax.f32 %v1178, %v1179
  %v1181 = vrot.slane %v1180, 2
  %v1182 = vmax.f32 %v1180, %v1181
  %v1183 = vrot.slane %v1182, 1
  %v1184 = vmax.f32 %v1182, %v1183
  %v1185 = vmax.f32 %v1101, %v1102
  %v1186 = vrot.slane %v1185, 4
  %v1187 = vmax.f32 %v1185, %v1186
  %v1188 = vrot.slane %v1187, 2
  %v1189 = vmax.f32 %v1187, %v1188
  %v1190 = vrot.slane %v1189, 1
  %v1191 = vmax.f32 %v1189, %v1190
  %v1192 = vmax.f32 %v1103, %v1104
  %v1193 = vrot.slane %v1192, 4
  %v1194 = vmax.f32 %v1192, %v1193
  %v1195 = vrot.slane %v1194, 2
  %v1196 = vmax.f32 %v1194, %v1195
  %v1197 = vrot.slane %v1196, 1
  %v1198 = vmax.f32 %v1196, %v1197
  %v1199 = vmax.f32 %v1105, %v1106
  %v1200 = vrot.slane %v1199, 4
  %v1201 = vmax.f32 %v1199, %v1200
  %v1202 = vrot.slane %v1201, 2
  %v1203 = vmax.f32 %v1201, %v1202
  %v1204 = vrot.slane %v1203, 1
  %v1205 = vmax.f32 %v1203, %v1204
  %v1206 = vmax.f32 %v1107, %v1108
  %v1207 = vrot.slane %v1206, 4
  %v1208 = vmax.f32 %v1206, %v1207
  %v1209 = vrot.slane %v1208, 2
  %v1210 = vmax.f32 %v1208, %v1209
  %v1211 = vrot.slane %v1210, 1
  %v1212 = vmax.f32 %v1210, %v1211
  %v1213 = vmax.f32 %v1109, %v1110
  %v1214 = vrot.slane %v1213, 4
  %v1215 = vmax.f32 %v1213, %v1214
  %v1216 = vrot.slane %v1215, 2
  %v1217 = vmax.f32 %v1215, %v1216
  %v1218 = vrot.slane %v1217, 1
  %v1219 = vmax.f32 %v1217, %v1218
  %v1220 = vmax.f32 %v1111, %v1112
  %v1221 = vrot.slane %v1220, 4
  %v1222 = vmax.f32 %v1220, %v1221
  %v1223 = vrot.slane %v1222, 2
  %v1224 = vmax.f32 %v1222, %v1223
  %v1225 = vrot.slane %v1224, 1
  %v1226 = vmax.f32 %v1224, %v1225
  %v1227 = vmax.f32 %v1113, %v1114
  %v1228 = vrot.slane %v1227, 4
  %v1229 = vmax.f32 %v1227, %v1228
  %v1230 = vrot.slane %v1229, 2
  %v1231 = vmax.f32 %v1229, %v1230
  %v1232 = vrot.slane %v1231, 1
  %v1233 = vmax.f32 %v1231, %v1232
  %v1234 = vmax.f32 %v1115, %v1116
  %v1235 = vrot.slane %v1234, 4
  %v1236 = vmax.f32 %v1234, %v1235
  %v1237 = vrot.slane %v1236, 2
  %v1238 = vmax.f32 %v1236, %v1237
  %v1239 = vrot.slane %v1238, 1
  %v1240 = vmax.f32 %v1238, %v1239
  %v1241 = vmax.f32 %v1117, %v1118
  %v1242 = vrot.slane %v1241, 4
  %v1243 = vmax.f32 %v1241, %v1242
  %v1244 = vrot.slane %v1243, 2
  %v1245 = vmax.f32 %v1243, %v1244
  %v1246 = vrot.slane %v1245, 1
  %v1247 = vmax.f32 %v1245, %v1246
  %v1248 = vmax.f32 %v1119, %v1120
  %v1249 = vrot.slane %v1248, 4
  %v1250 = vmax.f32 %v1248, %v1249
  %v1251 = vrot.slane %v1250, 2
  %v1252 = vmax.f32 %v1250, %v1251
  %v1253 = vrot.slane %v1252, 1
  %v1254 = vmax.f32 %v1252, %v1253
  %v1255 = vmax.f32 %v1121, %v1122
  %v1256 = vrot.slane %v1255, 4
  %v1257 = vmax.f32 %v1255, %v1256
  %v1258 = vrot.slane %v1257, 2
  %v1259 = vmax.f32 %v1257, %v1258
  %v1260 = vrot.slane %v1259, 1
  %v1261 = vmax.f32 %v1259, %v1260
  %v1262 = vmax.f32 %v1123, %v1124
  %v1263 = vrot.slane %v1262, 4
  %v1264 = vmax.f32 %v1262, %v1263
  %v1265 = vrot.slane %v1264, 2
  %v1266 = vmax.f32 %v1264, %v1265
  %v1267 = vrot.slane %v1266, 1
  %v1268 = vmax.f32 %v1266, %v1267
  %v1269 = vmax.f32 %v1125, %v1126
  %v1270 = vrot.slane %v1269, 4
  %v1271 = vmax.f32 %v1269, %v1270
  %v1272 = vrot.slane %v1271, 2
  %v1273 = vmax.f32 %v1271, %v1272
  %v1274 = vrot.slane %v1273, 1
  %v1275 = vmax.f32 %v1273, %v1274
  %v1276 = vmax.f32 %v1127, %v1128
  %v1277 = vrot.slane %v1276, 4
  %v1278 = vmax.f32 %v1276, %v1277
  %v1279 = vrot.slane %v1278, 2
  %v1280 = vmax.f32 %v1278, %v1279
  %v1281 = vrot.slane %v1280, 1
  %v1282 = vmax.f32 %v1280, %v1281
  %v1283 = vmax.f32 %v1129, %v1130
  %v1284 = vrot.slane %v1283, 4
  %v1285 = vmax.f32 %v1283, %v1284
  %v1286 = vrot.slane %v1285, 2
  %v1287 = vmax.f32 %v1285, %v1286
  %v1288 = vrot.slane %v1287, 1
  %v1289 = vmax.f32 %v1287, %v1288
  %v1290 = vmax.f32 %v1131, %v1132
  %v1291 = vrot.slane %v1290, 4
  %v1292 = vmax.f32 %v1290, %v1291
  %v1293 = vrot.slane %v1292, 2
  %v1294 = vmax.f32 %v1292, %v1293
  %v1295 = vrot.slane %v1294, 1
  %v1296 = vmax.f32 %v1294, %v1295
  %v1297 = vmax.f32 %v1133, %v1134
  %v1298 = vrot.slane %v1297, 4
  %v1299 = vmax.f32 %v1297, %v1298
  %v1300 = vrot.slane %v1299, 2
  %v1301 = vmax.f32 %v1299, %v1300
  %v1302 = vrot.slane %v1301, 1
  %v1303 = vmax.f32 %v1301, %v1302
  %v1304 = vmax.f32 %v1135, %v1136
  %v1305 = vrot.slane %v1304, 4
  %v1306 = vmax.f32 %v1304, %v1305
  %v1307 = vrot.slane %v1306, 2
  %v1308 = vmax.f32 %v1306, %v1307
  %v1309 = vrot.slane %v1308, 1
  %v1310 = vmax.f32 %v1308, %v1309
  %v1311 = vmax.f32 %v1137, %v1138
  %v1312 = vrot.slane %v1311, 4
  %v1313 = vmax.f32 %v1311, %v1312
  %v1314 = vrot.slane %v1313, 2
  %v1315 = vmax.f32 %v1313, %v1314
  %v1316 = vrot.slane %v1315, 1
  %v1317 = vmax.f32 %v1315, %v1316
  %v1318 = vmax.f32 %v1139, %v1140
  %v1319 = vrot.slane %v1318, 4
  %v1320 = vmax.f32 %v1318, %v1319
  %v1321 = vrot.slane %v1320, 2
  %v1322 = vmax.f32 %v1320, %v1321
  %v1323 = vrot.slane %v1322, 1
  %v1324 = vmax.f32 %v1322, %v1323
  %v1325 = vmax.f32 %v1141, %v1142
  %v1326 = vrot.slane %v1325, 4
  %v1327 = vmax.f32 %v1325, %v1326
  %v1328 = vrot.slane %v1327, 2
  %v1329 = vmax.f32 %v1327, %v1328
  %v1330 = vrot.slane %v1329, 1
  %v1331 = vmax.f32 %v1329, %v1330
  %v1332 = vmax.f32 %v1143, %v1144
  %v1333 = vrot.slane %v1332, 4
  %v1334 = vmax.f32 %v1332, %v1333
  %v1335 = vrot.slane %v1334, 2
  %v1336 = vmax.f32 %v1334, %v1335
  %v1337 = vrot.slane %v1336, 1
  %v1338 = vmax.f32 %v1336, %v1337
  %v1339 = vmax.f32 %v1145, %v1146
  %v1340 = vrot.slane %v1339, 4
  %v1341 = vmax.f32 %v1339, %v1340
  %v1342 = vrot.slane %v1341, 2
  %v1343 = vmax.f32 %v1341, %v1342
  %v1344 = vrot.slane %v1343, 1
  %v1345 = vmax.f32 %v1343, %v1344
  %v1346 = vmax.f32 %v1147, %v1148
  %v1347 = vrot.slane %v1346, 4
  %v1348 = vmax.f32 %v1346, %v1347
  %v1349 = vrot.slane %v1348, 2
  %v1350 = vmax.f32 %v1348, %v1349
  %v1351 = vrot.slane %v1350, 1
  %v1352 = vmax.f32 %v1350, %v1351
  %v1353 = vmax.f32 %v1149, %v1150
  %v1354 = vrot.slane %v1353, 4
  %v1355 = vmax.f32 %v1353, %v1354
  %v1356 = vrot.slane %v1355, 2
  %v1357 = vmax.f32 %v1355, %v1356
  %v1358 = vrot.slane %v1357, 1
  %v1359 = vmax.f32 %v1357, %v1358
  %v1360 = vmax.f32 %v1151, %v1152
  %v1361 = vrot.slane %v1360, 4
  %v1362 = vmax.f32 %v1360, %v1361
  %v1363 = vrot.slane %v1362, 2
  %v1364 = vmax.f32 %v1362, %v1363
  %v1365 = vrot.slane %v1364, 1
  %v1366 = vmax.f32 %v1364, %v1365
  %v1367 = vmax.f32 %v1153, %v1154
  %v1368 = vrot.slane %v1367, 4
  %v1369 = vmax.f32 %v1367, %v1368
  %v1370 = vrot.slane %v1369, 2
  %v1371 = vmax.f32 %v1369, %v1370
  %v1372 = vrot.slane %v1371, 1
  %v1373 = vmax.f32 %v1371, %v1372
  %v1374 = vmax.f32 %v1155, %v1156
  %v1375 = vrot.slane %v1374, 4
  %v1376 = vmax.f32 %v1374, %v1375
  %v1377 = vrot.slane %v1376, 2
  %v1378 = vmax.f32 %v1376, %v1377
  %v1379 = vrot.slane %v1378, 1
  %v1380 = vmax.f32 %v1378, %v1379
  %vm1413 = vcmask 1041409
  %v1414 = vsel %vm1413, %v1170, %v1163
  %vm1415 = vcmask 1042434
  %v1416 = vsel %vm1415, %v1177, %v1414
  %vm1417 = vcmask 1043459
  %v1418 = vsel %vm1417, %v1184, %v1416
  %vm1419 = vcmask 1044484
  %v1420 = vsel %vm1419, %v1191, %v1418
  %vm1421 = vcmask 1045509
  %v1422 = vsel %vm1421, %v1198, %v1420
  %vm1423 = vcmask 1046534
  %v1424 = vsel %vm1423, %v1205, %v1422
  %vm1425 = vcmask 1047559
  %v1426 = vsel %vm1425, %v1212, %v1424
  %v1427 = vsel %vm1413, %v1226, %v1219
  %v1428 = vsel %vm1415, %v1233, %v1427
  %v1429 = vsel %vm1417, %v1240, %v1428
  %v1430 = vsel %vm1419, %v1247, %v1429
  %v1431 = vsel %vm1421, %v1254, %v1430
  %v1432 = vsel %vm1423, %v1261, %v1431
  %v1433 = vsel %vm1425, %v1268, %v1432
  %v1434 = vsel %vm1413, %v1282, %v1275
  %v1435 = vsel %vm1415, %v1289, %v1434
  %v1436 = vsel %vm1417, %v1296, %v1435
  %v1437 = vsel %vm1419, %v1303, %v1436
  %v1438 = vsel %vm1421, %v1310, %v1437
  %v1439 = vsel %vm1423, %v1317, %v1438
  %v1440 = vsel %vm1425, %v1324, %v1439
  %v1441 = vsel %vm1413, %v1338, %v1331
  %v1442 = vsel %vm1415, %v1345, %v1441
  %v1443 = vsel %vm1417, %v1352, %v1442
  %v1444 = vsel %vm1419, %v1359, %v1443
  %v1445 = vsel %vm1421, %v1366, %v1444
  %v1446 = vsel %vm1423, %v1373, %v1445
  %v1447 = vsel %vm1425, %v1380, %v1446
  %1452 = vst [vmem:[%s5] sm:$0xff] %v1426
  %1453 = vst [vmem:[%s5 + $0x8] sm:$0xff] %v1433
  %1454 = vst [vmem:[%s5 + $0x10] sm:$0xff] %v1440
  %1455 = vst [vmem:[%s5 + $0x18] sm:$0xff] %v1447
  // Predicated region
  $region22: #{transition_down.1} parent=0 // pred_check
    _
  $region23: #{transition_down.1} parent=0 // pred_check_branch
    %1457 = sbr.rel (0) target = $region25
  $region24: #{transition_down.1} parent=0 // pred_region
    _
  $region25: #{transition_down.1} parent=0 // pred_fallthru
    _
  // Predicated region
  $region26: #{transition_down.1} parent=0 // pred_check
    _
  $region27: #{transition_down.1} parent=0 // pred_check_branch
    %1459 = sbr.rel (0) target = $region29
  $region28: #{transition_down.1} parent=0 // pred_region
    _
  $region29: #{transition_down.1} parent=0 // pred_fallthru
    _

</llo_original>
